<compile_context>
chip_gen: v7x
topology: tpu7x:2x2x1
jax: 0.10.0
libtpu: 0.0.40
codegen_flags: <defaults>
</compile_context>

<pallas_src>
import jax
import jax.numpy as jnp
import numpy as np
from jax.experimental import pallas as pl
from jax.experimental.pallas import tpu as pltpu


def _round_up(x, m):
    return ((x + m - 1) // m) * m


# ----------------------------------------------------------------------------- stage 1
def _quantize_table(weight, alpha, beta, *, bit, block_f=512):
    """Wq = clamp(round((W - beta)/a), low, high) * a + beta, computed once over the table."""
    feature_num, emb_dim = weight.shape
    low = float(-(2 ** (bit - 1)))
    high = float(2 ** (bit - 1) - 1)

    a_eff = (jnp.abs(alpha).astype(jnp.float32) + jnp.float32(1e-10)).reshape(1)  # SMEM scalar
    beta2d = beta.reshape(1, emb_dim).astype(jnp.float32)

    # Full first dim when small (exempt from the 8-sublane rule); otherwise 512-row tiles.
    bf = feature_num if feature_num <= block_f else block_f
    grid_f = pl.cdiv(feature_num, bf)

    def kernel(a_ref, w_ref, b_ref, wq_ref):
        a = a_ref[0]
        wa = (w_ref[...] - b_ref[...]) / a                      # same op order as the torch code
        q = jnp.clip(jnp.round(wa), low, high)                  # round-half-even == torch.round
        wq_ref[...] = (q * a + b_ref[...]).astype(wq_ref.dtype)

    return pl.pallas_call(
        kernel,
        out_shape=jax.ShapeDtypeStruct((feature_num, emb_dim), weight.dtype),
        grid_spec=pltpu.PrefetchScalarGridSpec(
            num_scalar_prefetch=0,
            grid=(grid_f,),
            in_specs=[
                pl.BlockSpec(memory_space=pltpu.MemorySpace.SMEM),   # |alpha|+eps scalar
                pl.BlockSpec((bf, emb_dim), lambda i: (i, 0)),       # weight tile
                pl.BlockSpec((1, emb_dim), lambda i: (0, 0)),        # beta row, resident
            ],
            out_specs=pl.BlockSpec((bf, emb_dim), lambda i: (i, 0)),
        ),
        compiler_params=pltpu.CompilerParams(dimension_semantics=("parallel",)),
    )(a_eff, weight, beta2d)


# ----------------------------------------------------------------------------- stage 2
def _pick_bn(n):
    # Largest row tile in {512, 256, 128} that still gives >= 4 grid steps, so both v7x
    # TensorCores get work and the idx/out DMAs double-buffer behind the MXU gather.
    for bn in (512, 256, 128):
        if pl.cdiv(n, bn) >= 4:
            return bn
    return 128


def _gather_rows(wq, idx_flat):
    """out[i] = wq[idx_flat[i]] via a chunked one-hot MXU gather (exact at HIGHEST precision)."""
    feature_num, emb_dim = wq.shape
    n = idx_flat.shape[0]

    bn = _pick_bn(n)
    n_pad = _round_up(n, bn)
    if n_pad != n:
        idx_flat = jnp.concatenate([idx_flat, jnp.zeros((n_pad - n,), jnp.int32)])  # pad -> row 0
    grid_n = n_pad // bn
    idx3d = idx_flat.reshape(grid_n, 1, bn)                     # lane-dense index tiles

    # K-chunking of the one-hot: bounded VMEM; chunk multiple of 256 for the 256-wide MXU.
    if feature_num <= 2048:
        kc, f_pad = feature_num, feature_num
    else:
        kc = 1024
        f_pad = _round_up(feature_num, kc)
    if f_pad != feature_num:
        wq = jnp.concatenate([wq, jnp.zeros((f_pad - feature_num, emb_dim), wq.dtype)], axis=0)
    num_chunks = f_pad // kc

    def kernel(idx_ref, wq_ref, o_ref):
        ids = idx_ref[0]                                        # (1, bn) int32, lane-resident

        def chunk(c):
            # One-hot built transposed, (kc, bn): ids broadcast across sublanes, so no relayout
            # of the lane-resident index vector is needed.  The iota is regenerated per chunk:
            # ~kc*bn/1024 VALU ops, negligible next to the 3-pass f32 MXU gather, while a
            # VMEM-cached iota would cost f_pad*bn*4 bytes and need a program_id==0 scratch
            # init that is unsafe under "parallel" (multi-core) semantics.
            feat = jax.lax.broadcasted_iota(jnp.int32, (kc, bn), 0)
            if c:
                feat = feat + c * kc
            oh_t = (feat == ids).astype(jnp.float32)            # exact 0/1 gather matrix
            return jax.lax.dot_general(
                oh_t, wq_ref[pl.ds(c * kc, kc), :],
                dimension_numbers=(((0,), (0,)), ((), ())),     # A^T B: contract feature dim
                preferred_element_type=jnp.float32,
                precision=jax.lax.Precision.HIGHEST,            # keep f32 table exact on MXU
            )

        acc = chunk(0)
        for c in range(1, num_chunks):                          # static unroll; 1 for small F
            acc = acc + chunk(c)
        o_ref[...] = acc.astype(o_ref.dtype)

    # Explicit VMEM budget, raised above the generation defaults only when actually needed.
    est_vmem = (2 * f_pad * emb_dim * 4        # resident quantized table (worst-case 2 bufs)
                + 2 * bn * emb_dim * 4         # output tiles
                + 2 * bn * 4                   # index tiles
                + 2 * bn * kc * 4              # one-hot + accumulator live values
                + (2 << 20))                   # slack / internal scratch
    cp = dict(dimension_semantics=("parallel",))
    if est_vmem > (16 << 20):                  # 16 MiB = smallest default scoped VMEM (v5e)
        cp["vmem_limit_bytes"] = int(min(max(est_vmem, 32 << 20), 120 << 20))

    out = pl.pallas_call(
        kernel,
        out_shape=jax.ShapeDtypeStruct((n_pad, emb_dim), wq.dtype),
        grid_spec=pltpu.PrefetchScalarGridSpec(
            num_scalar_prefetch=0,
            grid=(grid_n,),
            in_specs=[
                pl.BlockSpec((1, 1, bn), lambda i: (i, 0, 0)),        # lane-dense idx tile
                pl.BlockSpec((f_pad, emb_dim), lambda i: (0, 0)),     # quantized table, resident
            ],
            out_specs=pl.BlockSpec((bn, emb_dim), lambda i: (i, 0)),  # lane-dense output
        ),
        compiler_params=pltpu.CompilerParams(**cp),
    )(idx3d, wq)
    return out[:n]


# ----------------------------------------------------------------------------- forward
def lsq_plus_embedding(x, weight, alpha, beta, *, bit):
    """Pallas equivalent of Lsq_Plus_Embedding.forward: out = fake_quant(W, alpha, beta)[x]."""
    orig_shape = x.shape
    idx_flat = x.reshape(-1).astype(jnp.int32)
    wq = _quantize_table(weight, alpha, beta, bit=bit)   # O(F*E), once per parameter update
    out = _gather_rows(wq, idx_flat)                     # O(N*E), pure gather per call
    return out.reshape(*orig_shape, weight.shape[1])


def lsq_plus_embedding_ref(x, weight, alpha, beta, *, bit):
    """Pure-JAX mirror of the PyTorch forward (quant applied to the gathered rows)."""
    emb = weight[x]
    a = jnp.abs(alpha).astype(jnp.float32) + jnp.float32(1e-10)
    low = float(-(2 ** (bit - 1)))
    high = float(2 ** (bit - 1) - 1)
    wa = (emb - beta) / a
    return jnp.clip(jnp.round(wa), low, high) * a + beta


if __name__ == "__main__":
    # Module config (deterministic, in-script).
    feature_num = 128
    emb_dim = 128
    bit = 8
    emb_std = 0.003                                  # emb_init = 'normal_0.003'

    key = jax.random.PRNGKey(0)
    kw, kb, kx = jax.random.split(key, 3)

    # Parameters, as in Lsq_Plus_Embedding.__init__.
    weight = jax.random.normal(kw, (feature_num, emb_dim), dtype=jnp.float32) * emb_std
    alpha = jnp.abs(weight).mean() * 2.0 / (2.0 ** (bit - 1)) ** 0.5
    # beta is zero-initialized in the module; use a small nonzero value so the per-channel
    # offset path is actually exercised (as it would be after training).
    beta = jax.random.normal(kb, (emb_dim,), dtype=jnp.float32) * 1e-3

    # Example input: batch of categorical feature indices, shape [batch, fields].
    x = jax.random.randint(kx, (32, 16), 0, feature_num, dtype=jnp.int32)

    out = lsq_plus_embedding(x, weight, alpha, beta, bit=bit)
    out = jax.block_until_ready(out)

    ref = lsq_plus_embedding_ref(x, weight, alpha, beta, bit=bit)

    assert out.shape == (32, 16, emb_dim)
    np.testing.assert_allclose(np.asarray(out), np.asarray(ref), rtol=1e-5, atol=1e-6)
    print("KERNEL_OK")
</pallas_src>

<mosaic_0001>
module attributes {stable_mosaic.version = 11 : i64} {
  func.func @kernel(%arg0: i32, %arg1: memref<1xf32, #tpu.memory_space<smem>>, %arg2: memref<128x128xf32, #tpu.memory_space<vmem>>, %arg3: memref<1x128xf32, #tpu.memory_space<vmem>>, %arg4: memref<128x128xf32, #tpu.memory_space<vmem>>) attributes {dimension_semantics = [#tpu.dimension_semantics<parallel>], iteration_bounds = array<i64: 1>, scalar_prefetch = 0 : i64, scratch_operands = 0 : i64, tpu.core_type = #tpu.core_type<tc>, window_params = [{transform_indices = @transform_0, window_bounds = array<i64: 1>}, {transform_indices = @transform_1, window_bounds = array<i64: 128, 128>}, {pipeline_mode = #tpu.pipeline_mode<synchronous>, transform_indices = @transform_2, window_bounds = array<i64: 1, 128>}, {transform_indices = @transform_3, window_bounds = array<i64: 128, 128>}]} {
    %c0 = arith.constant 0 : index
    %0 = memref.load %arg1[%c0] : memref<1xf32, #tpu.memory_space<smem>>
    %c0_0 = arith.constant 0 : index
    %c0_1 = arith.constant 0 : index
    %1 = vector.load %arg2[%c0_0, %c0_1] : memref<128x128xf32, #tpu.memory_space<vmem>>, vector<128x128xf32>
    %c0_2 = arith.constant 0 : index
    %c0_3 = arith.constant 0 : index
    %2 = vector.load %arg3[%c0_2, %c0_3] : memref<1x128xf32, #tpu.memory_space<vmem>>, vector<1x128xf32>
    %3 = vector.broadcast %2 : vector<1x128xf32> to vector<128x128xf32>
    %4 = arith.subf %1, %3 : vector<128x128xf32>
    %5 = vector.broadcast %0 : f32 to vector<128x128xf32>
    %6 = arith.divf %4, %5 : vector<128x128xf32>
    %7 = math.roundeven %6 : vector<128x128xf32>
    %cst = arith.constant -1.280000e+02 : f32
    %cst_4 = arith.constant 1.270000e+02 : f32
    %8 = vector.broadcast %cst : f32 to vector<128x128xf32>
    %9 = arith.maximumf %8, %7 : vector<128x128xf32>
    %10 = vector.broadcast %cst_4 : f32 to vector<128x128xf32>
    %11 = arith.minimumf %10, %9 : vector<128x128xf32>
    %12 = vector.broadcast %0 : f32 to vector<128x128xf32>
    %13 = arith.mulf %11, %12 : vector<128x128xf32>
    %c0_5 = arith.constant 0 : index
    %c0_6 = arith.constant 0 : index
    %14 = vector.load %arg3[%c0_5, %c0_6] : memref<1x128xf32, #tpu.memory_space<vmem>>, vector<1x128xf32>
    %15 = vector.broadcast %14 : vector<1x128xf32> to vector<128x128xf32>
    %16 = arith.addf %13, %15 : vector<128x128xf32>
    %c0_7 = arith.constant 0 : index
    %c0_8 = arith.constant 0 : index
    %17 = vector.load %arg4[%c0_7, %c0_8] : memref<128x128xf32, #tpu.memory_space<vmem>>, vector<128x128xf32>
    tpu.vector_store %arg4[%c0_7, %c0_8], %16 {strides = array<i32>} : memref<128x128xf32, #tpu.memory_space<vmem>>, vector<128x128xf32>,
    return
  }
  func.func @transform_0(%arg0: i32) -> i32 {
    %c0_i32 = arith.constant 0 : i32
    %c0_i32_0 = arith.constant 0 : i32
    return %c0_i32 : i32
  }
  func.func @transform_1(%arg0: i32) -> (i32, i32) {
    %c0_i32 = arith.constant 0 : i32
    %c0_i32_0 = arith.constant 0 : i32
    return %arg0, %c0_i32 : i32, i32
  }
  func.func @transform_2(%arg0: i32) -> (i32, i32) {
    %c0_i32 = arith.constant 0 : i32
    %c0_i32_0 = arith.constant 0 : i32
    %c0_i32_1 = arith.constant 0 : i32
    return %c0_i32, %c0_i32_0 : i32, i32
  }
  func.func @transform_3(%arg0: i32) -> (i32, i32) {
    %c0_i32 = arith.constant 0 : i32
    %c0_i32_0 = arith.constant 0 : i32
    return %arg0, %c0_i32 : i32, i32
  }
}

</mosaic_0001>

<llo_original>
// kernel: tpu_custom_call.1
$region0: #{tpu_custom_call.1}
  #allocation0 [shape = 'u32[]', space=smem, size = 0x4, offset = 0x4, fixed_abs, tag = 'smem constant byte address 0x4 - core index']
  #allocation1 [shape = 'u32[144,128]{1,0:T(1,128)}', space=vmem, size = 0x12000, scoped, tag = 'internal scratch']
  #allocation2 [shape = 'f32[1]{0:T(128)S(6)}', space=smem, size = 0x200, scoped, tag = 'scoped memory for tpu_custom_call.1']
  %s0 = inlined_call_operand.<no memory space> [shape: f32[1], index: 0, kind: input, shape index: {}]
  %s1 = inlined_call_operand.hbm [shape: f32[128,128], index: 1, kind: input, shape index: {}]
  %s2 = inlined_call_operand.vmem [shape: f32[1,128], index: 2, kind: input, shape index: {}]
  %s3 = inlined_call_operand.hbm [shape: f32[128,128], index: 3, kind: output, shape index: {}]
  %s4 = sld [smem:[#allocation0]]
  $region26: #{tpu_custom_call.1} parent=0
    _
  %s6 = ssub.s32 1, %s4
  %s7 = scalar_select 0, %s6, %s4
  %8 = sst [smem:[#allocation2]] %s0
  $region1: #{tpu_custom_call.1} parent=0
    #allocation3 [shape = 'u8[65536]{0}', space=vmem, size = 0x10000, scoped, tag = 'input window, operand 1, single buffered']
    #allocation4 [shape = 's32[1]{0}', space=sflag, size = 0x4, scoped, tag = 'scoped memory for tpu_custom_call.1']
    #allocation5 [shape = 's32[1]{0}', space=sflag, size = 0x4, scoped, tag = 'scoped memory for tpu_custom_call.1']
    #allocation6 [shape = 'u8[65536]{0}', space=vmem, size = 0x10000, scoped, tag = 'output window, operand 0, single buffered']
    %9 = vsyncpa [#allocation4], 0
    %10 = vsyncpa [#allocation5], 0
    // Predicated region
    $region2: #{tpu_custom_call.1} parent=1 // pred_check
      _
    $region3: #{tpu_custom_call.1} parent=1 // pred_check_branch
      %12 = sbr.rel (0) target = $region5
    $region4: #{tpu_custom_call.1} parent=1 // pred_region
      _
    $region5: #{tpu_custom_call.1} parent=1 // pred_fallthru
      _
    // Predicated region
    $region6: #{tpu_custom_call.1} parent=1 // pred_check
      _
    $region7: #{tpu_custom_call.1} parent=1 // pred_check_branch
      %14 = sbr.rel (0) target = $region9
    $region8: #{tpu_custom_call.1} parent=1 // pred_region
      %s16 = ssub.s32 2048, 2048
      %17 = vsyncadd [#allocation4], %s16
      %s18 = sshll.u32 [#allocation3], 4
      %s19 = int_to_ptr.vmem [resolvable:$true] %s18
      %24 = dma.hbm_to_vmem [thread:$0]  %s1, 2048, %s19, [#allocation4], 128, 128, 8
    $region9: #{tpu_custom_call.1} parent=1 // pred_fallthru
      _
    // Predicated region
    $region10: #{tpu_custom_call.1} parent=1 // pred_check
      _
    $region11: #{tpu_custom_call.1} parent=1 // pred_check_branch
      %26 = sbr.rel (0) target = $region13
    $region12: #{tpu_custom_call.1} parent=1 // pred_region
      _
    $region13: #{tpu_custom_call.1} parent=1 // pred_fallthru
      _
    // Predicated region
    $region14: #{tpu_custom_call.1} parent=1 // pred_check
      _
    $region15: #{tpu_custom_call.1} parent=1 // pred_check_branch
      %28 = sbr.rel (0) target = $region17
    $region16: #{tpu_custom_call.1} parent=1 // pred_region
      %29 = dma.done [#allocation4], 2048
    $region17: #{tpu_custom_call.1} parent=1 // pred_fallthru
      _
    %s30 = sld [smem:[#allocation2]]
    %v31 = vld [vmem:[#allocation3] sm:$0xff]
    %v32 = vld [vmem:[#allocation3 + $0x8] sm:$0xff]
    %v33 = vld [vmem:[#allocation3 + $0x10] sm:$0xff]
    %v34 = vld [vmem:[#allocation3 + $0x18] sm:$0xff]
    %v35 = vld [vmem:[#allocation3 + $0x20] sm:$0xff]
    %v36 = vld [vmem:[#allocation3 + $0x28] sm:$0xff]
    %v37 = vld [vmem:[#allocation3 + $0x30] sm:$0xff]
    %v38 = vld [vmem:[#allocation3 + $0x38] sm:$0xff]
    %v39 = vld [vmem:[#allocation3 + $0x40] sm:$0xff]
    %v40 = vld [vmem:[#allocation3 + $0x48] sm:$0xff]
    %v41 = vld [vmem:[#allocation3 + $0x50] sm:$0xff]
    %v42 = vld [vmem:[#allocation3 + $0x58] sm:$0xff]
    %v43 = vld [vmem:[#allocation3 + $0x60] sm:$0xff]
    %v44 = vld [vmem:[#allocation3 + $0x68] sm:$0xff]
    %v45 = vld [vmem:[#allocation3 + $0x70] sm:$0xff]
    %v46 = vld [vmem:[#allocation3 + $0x78] sm:$0xff]
    %v47 = vld [vmem:[%s2] sm:$0x1]
    %v49 = vlaneseq
    %v50 = vshrl.u32 %v49, 7
    %v51 = vsub.s32 0, %v50
    %v52 = vrot.slane %v47, %v51
    %v54 = vsub.f32 %v31, %v52
    %v55 = vsub.f32 %v32, %v52
    %v56 = vsub.f32 %v33, %v52
    %v57 = vsub.f32 %v34, %v52
    %v58 = vsub.f32 %v35, %v52
    %v59 = vsub.f32 %v36, %v52
    %v60 = vsub.f32 %v37, %v52
    %v61 = vsub.f32 %v38, %v52
    %v62 = vsub.f32 %v39, %v52
    %v63 = vsub.f32 %v40, %v52
    %v64 = vsub.f32 %v41, %v52
    %v65 = vsub.f32 %v42, %v52
    %v66 = vsub.f32 %v43, %v52
    %v67 = vsub.f32 %v44, %v52
    %v68 = vsub.f32 %v45, %v52
    %v69 = vsub.f32 %v46, %v52
    %v70 = vstv %s30
    %v71 = vrcp.pop %v70
    %v72 = vmul.f32 %v54, %v71
    %v73 = vmul.f32 %v55, %v71
    %v74 = vmul.f32 %v56, %v71
    %v75 = vmul.f32 %v57, %v71
    %v76 = vmul.f32 %v58, %v71
    %v77 = vmul.f32 %v59, %v71
    %v78 = vmul.f32 %v60, %v71
    %v79 = vmul.f32 %v61, %v71
    %v80 = vmul.f32 %v62, %v71
    %v81 = vmul.f32 %v63, %v71
    %v82 = vmul.f32 %v64, %v71
    %v83 = vmul.f32 %v65, %v71
    %v84 = vmul.f32 %v66, %v71
    %v85 = vmul.f32 %v67, %v71
    %v86 = vmul.f32 %v68, %v71
    %v87 = vmul.f32 %v69, %v71
    %v88 = vround.ne.pseudo %v72
    %v89 = vround.ne.pseudo %v73
    %v90 = vround.ne.pseudo %v74
    %v91 = vround.ne.pseudo %v75
    %v92 = vround.ne.pseudo %v76
    %v93 = vround.ne.pseudo %v77
    %v94 = vround.ne.pseudo %v78
    %v95 = vround.ne.pseudo %v79
    %v96 = vround.ne.pseudo %v80
    %v97 = vround.ne.pseudo %v81
    %v98 = vround.ne.pseudo %v82
    %v99 = vround.ne.pseudo %v83
    %v100 = vround.ne.pseudo %v84
    %v101 = vround.ne.pseudo %v85
    %v102 = vround.ne.pseudo %v86
    %v103 = vround.ne.pseudo %v87
    %v104 = vmax.f32 %v88, -128.0
    %v105 = vmax.f32 %v89, -128.0
    %v106 = vmax.f32 %v90, -128.0
    %v107 = vmax.f32 %v91, -128.0
    %v108 = vmax.f32 %v92, -128.0
    %v109 = vmax.f32 %v93, -128.0
    %v110 = vmax.f32 %v94, -128.0
    %v111 = vmax.f32 %v95, -128.0
    %v112 = vmax.f32 %v96, -128.0
    %v113 = vmax.f32 %v97, -128.0
    %v114 = vmax.f32 %v98, -128.0
    %v115 = vmax.f32 %v99, -128.0
    %v116 = vmax.f32 %v100, -128.0
    %v117 = vmax.f32 %v101, -128.0
    %v118 = vmax.f32 %v102, -128.0
    %v119 = vmax.f32 %v103, -128.0
    %v120 = vmin.f32 %v104, 127.0
    %v121 = vmin.f32 %v105, 127.0
    %v122 = vmin.f32 %v106, 127.0
    %v123 = vmin.f32 %v107, 127.0
    %v124 = vmin.f32 %v108, 127.0
    %v125 = vmin.f32 %v109, 127.0
    %v126 = vmin.f32 %v110, 127.0
    %v127 = vmin.f32 %v111, 127.0
    %v128 = vmin.f32 %v112, 127.0
    %v129 = vmin.f32 %v113, 127.0
    %v130 = vmin.f32 %v114, 127.0
    %v131 = vmin.f32 %v115, 127.0
    %v132 = vmin.f32 %v116, 127.0
    %v133 = vmin.f32 %v117, 127.0
    %v134 = vmin.f32 %v118, 127.0
    %v135 = vmin.f32 %v119, 127.0
    %v136 = vmul.f32 %v120, %v70
    %v137 = vmul.f32 %v121, %v70
    %v138 = vmul.f32 %v122, %v70
    %v139 = vmul.f32 %v123, %v70
    %v140 = vmul.f32 %v124, %v70
    %v141 = vmul.f32 %v125, %v70
    %v142 = vmul.f32 %v126, %v70
    %v143 = vmul.f32 %v127, %v70
    %v144 = vmul.f32 %v128, %v70
    %v145 = vmul.f32 %v129, %v70
    %v146 = vmul.f32 %v130, %v70
    %v147 = vmul.f32 %v131, %v70
    %v148 = vmul.f32 %v132, %v70
    %v149 = vmul.f32 %v133, %v70
    %v150 = vmul.f32 %v134, %v70
    %v151 = vmul.f32 %v135, %v70
    %v152 = vadd.f32 %v136, %v52
    %v153 = vadd.f32 %v137, %v52
    %v154 = vadd.f32 %v138, %v52
    %v155 = vadd.f32 %v139, %v52
    %v156 = vadd.f32 %v140, %v52
    %v157 = vadd.f32 %v141, %v52
    %v158 = vadd.f32 %v142, %v52
    %v159 = vadd.f32 %v143, %v52
    %v160 = vadd.f32 %v144, %v52
    %v161 = vadd.f32 %v145, %v52
    %v162 = vadd.f32 %v146, %v52
    %v163 = vadd.f32 %v147, %v52
    %v164 = vadd.f32 %v148, %v52
    %v165 = vadd.f32 %v149, %v52
    %v166 = vadd.f32 %v150, %v52
    %v167 = vadd.f32 %v151, %v52
    %168 = vst [vmem:[#allocation6] sm:$0xff] %v152
    %169 = vst [vmem:[#allocation6 + $0x8] sm:$0xff] %v153
    %170 = vst [vmem:[#allocation6 + $0x10] sm:$0xff] %v154
    %171 = vst [vmem:[#allocation6 + $0x18] sm:$0xff] %v155
    %172 = vst [vmem:[#allocation6 + $0x20] sm:$0xff] %v156
    %173 = vst [vmem:[#allocation6 + $0x28] sm:$0xff] %v157
    %174 = vst [vmem:[#allocation6 + $0x30] sm:$0xff] %v158
    %175 = vst [vmem:[#allocation6 + $0x38] sm:$0xff] %v159
    %176 = vst [vmem:[#allocation6 + $0x40] sm:$0xff] %v160
    %177 = vst [vmem:[#allocation6 + $0x48] sm:$0xff] %v161
    %178 = vst [vmem:[#allocation6 + $0x50] sm:$0xff] %v162
    %179 = vst [vmem:[#allocation6 + $0x58] sm:$0xff] %v163
    %180 = vst [vmem:[#allocation6 + $0x60] sm:$0xff] %v164
    %181 = vst [vmem:[#allocation6 + $0x68] sm:$0xff] %v165
    %182 = vst [vmem:[#allocation6 + $0x70] sm:$0xff] %v166
    %183 = vst [vmem:[#allocation6 + $0x78] sm:$0xff] %v167
    // Predicated region
    $region18: #{tpu_custom_call.1} parent=1 // pred_check
      _
    $region19: #{tpu_custom_call.1} parent=1 // pred_check_branch
      %185 = sbr.rel (0) target = $region21
    $region20: #{tpu_custom_call.1} parent=1 // pred_region
      %s187 = ssub.s32 2048, 2048
      %188 = vsyncadd [#allocation5], %s187
      %s189 = sshll.u32 [#allocation6], 4
      %s190 = int_to_ptr.vmem [resolvable:$true] %s189
      %195 = dma.vmem_to_hbm [thread:$0]  %s190, 2048, %s3, [#allocation5], 128, 128, 8
    $region21: #{tpu_custom_call.1} parent=1 // pred_fallthru
      _
    // Predicated region
    $region22: #{tpu_custom_call.1} parent=1 // pred_check
      _
    $region23: #{tpu_custom_call.1} parent=1 // pred_check_branch
      %197 = sbr.rel (0) target = $region25
    $region24: #{tpu_custom_call.1} parent=1 // pred_region
      %198 = dma.done [#allocation5], 2048
    $region25: #{tpu_custom_call.1} parent=1 // pred_fallthru
      _
    %199 = vsyncpa [#allocation4], 1
    %200 = vsyncpa [#allocation5], 1

</llo_original>
